<compile_context>
chip_gen: v5e
topology: v5e:2x2
jax: 0.10.0
libtpu: 0.0.40
codegen_flags: <defaults>
</compile_context>

<pallas_src>
import jax
import jax.numpy as jnp
from jax import lax
from jax.experimental import pallas as pl
from jax.experimental.pallas import tpu as pltpu

_STATIC_UNROLL_H = 32  # fully unroll the interior H loop up to this many rows


def _same_padding(kernel_size):
    """Replicates the PyTorch computation; returns ((d_l,d_r),(h_l,h_r),(w_l,w_r))."""
    pads = []
    for k in kernel_size:  # (depth, height, width) -> pads for (D, H, W)
        left = k // 2 + (k - 2 * (k // 2)) - 1
        right = k // 2
        pads.append((int(left), int(right)))
    return tuple(pads)


def _tpu_tuning():
    """Per-generation (vmem_limit_bytes, target_tile_bytes, min_grid_steps)."""
    vmem_limit, target_tile, min_steps = 32 << 20, 6 << 20, 2  # safe defaults
    try:
        info = pltpu.get_tpu_info()
        vmem_cap = getattr(info, "vmem_capacity_bytes", None)
        if vmem_cap is not None:
            if vmem_cap >= (96 << 20):
                # v5e/v6e class: 128 MiB VMEM, 1 TensorCore -> biggest single tiles.
                vmem_limit, target_tile, min_steps = 64 << 20, 10 << 20, 1
            else:
                # v7x class: 64 MiB VMEM per TC, 2 TCs -> modest tiles, enough
                # grid steps to keep both cores busy and the pipeline primed.
                vmem_limit, target_tile, min_steps = 32 << 20, 5 << 20, 8
    except Exception:
        pass
    return vmem_limit, target_tile, min_steps


def _pick_row_block(num_rows, in_row_bytes, out_row_bytes,
                    target_tile_bytes, vmem_limit_bytes, min_steps):
    """Largest divisor row-block whose double-buffered tiles fit the VMEM budget."""
    buffered_per_row = 2 * (in_row_bytes + out_row_bytes)  # in + out, x2 buffers
    budget = int(vmem_limit_bytes * 0.75)                  # leave headroom
    divisors = [d for d in range(1, num_rows + 1) if num_rows % d == 0]
    fits = [d for d in divisors
            if d * buffered_per_row <= budget
            and d * out_row_bytes <= target_tile_bytes]
    if not fits:
        return None
    preferred = [d for d in fits if num_rows // d >= min_steps]
    return max(preferred) if preferred else max(fits)


def conv3d_padding_same(x, kernel_size, pad_value):
    """x: (N, C, D, H, W) -> constant-padded (N, C, D_out, H_out, W_out)."""
    N, C, D, H, W = x.shape
    (d_l, d_r), (h_l, h_r), (w_l, w_r) = _same_padding(kernel_size)
    D_out, H_out, W_out = D + d_l + d_r, H + h_l + h_r, W + w_l + w_r
    HW, HWo = H * W, H_out * W_out
    R = N * C
    pad_value = float(pad_value)  # Python literal -> lowered as a constant splat
    dtype = x.dtype
    itemsize = jnp.dtype(dtype).itemsize

    vmem_limit, target_tile, min_steps = _tpu_tuning()
    bc = _pick_row_block(R, D * HW * itemsize, D_out * HWo * itemsize,
                         target_tile, vmem_limit, min_steps)
    if bc is None:
        # TODO(synk): a single (D, H*W) row exceeds the VMEM budget; this needs a
        # halo-aware 2-D grid over (rows, D). Fall back to XLA's pad for now.
        return jnp.pad(x, ((0, 0), (0, 0), (d_l, d_r), (h_l, h_r), (w_l, w_r)),
                       mode="constant", constant_values=pad_value)

    grid = (R // bc,)
    # Metadata-only reshape: merge (N,C) and (H,W) -> lane-dense rows for the DMA.
    x2 = x.reshape(R, D, HW)

    def pad_kernel(x_ref, o_ref):
        # (1) One fully lane-dense, unmasked blanket store of the pad value over
        #     the whole output tile.  Covers all D/H/W halo regions at once with
        #     a single hoisted constant; re-writing the interior in (2) is much
        #     cheaper than the many narrow masked pad stores it replaces.
        o_ref[...] = jnp.full((bc, D_out, HWo), pad_value, dtype=dtype)

        # (2) Interior data.
        if w_l == 0 and w_r == 0:
            # No W padding: the interior is one contiguous lane span -> one store.
            o_ref[:, d_l:d_l + D, h_l * W_out:(h_l + H) * W_out] = x_ref[...]
        elif H <= _STATIC_UNROLL_H:
            # Small H: static unroll, one (bc, D, W) store per row, static offsets.
            for h in range(H):
                base = (h_l + h) * W_out + w_l
                o_ref[:, d_l:d_l + D, base:base + W] = \
                    x_ref[:, :, h * W:(h + 1) * W]
        else:
            # Large H: bounded-unroll loop keeps code size / vreg pressure sane
            # while still giving the scheduler a few iterations of visibility.
            def body(h, carry):
                base = (h_l + h) * W_out + w_l
                o_ref[:, d_l:d_l + D, pl.ds(base, W)] = \
                    x_ref[:, :, pl.ds(h * W, W)]
                return carry
            lax.fori_loop(0, H, body, 0, unroll=8)

    in_bytes = R * D * HW * itemsize
    out_bytes = R * D_out * HWo * itemsize

    out2 = pl.pallas_call(
        pad_kernel,
        out_shape=jax.ShapeDtypeStruct((R, D_out, HWo), dtype),
        grid_spec=pltpu.PrefetchScalarGridSpec(
            num_scalar_prefetch=0,
            grid=grid,
            in_specs=[pl.BlockSpec((bc, D, HW), lambda r: (r, 0, 0))],
            out_specs=pl.BlockSpec((bc, D_out, HWo), lambda r: (r, 0, 0)),
        ),
        compiler_params=pltpu.CompilerParams(
            dimension_semantics=("parallel",),
            vmem_limit_bytes=vmem_limit,
        ),
        cost_estimate=pl.CostEstimate(
            flops=0, transcendentals=0, bytes_accessed=in_bytes + out_bytes),
    )(x2)

    # Metadata-only reshape back to NCDHW.
    return out2.reshape(N, C, D_out, H_out, W_out)


if __name__ == "__main__":
    key = jax.random.PRNGKey(0)

    def _check(x, kernel_size, pad_value):
        y = jax.block_until_ready(conv3d_padding_same(x, kernel_size, pad_value))
        (d_l, d_r), (h_l, h_r), (w_l, w_r) = _same_padding(kernel_size)
        y_ref = jnp.pad(
            x, ((0, 0), (0, 0), (d_l, d_r), (h_l, h_r), (w_l, w_r)),
            mode="constant", constant_values=float(pad_value))
        assert y.shape == y_ref.shape, (y.shape, y_ref.shape)
        assert jnp.array_equal(y, y_ref), "Pallas padding mismatch vs reference"

    # Case 1: even/odd/odd kernel (2,3,5) -> all three axes padded (W-interleave path).
    x1 = jax.random.normal(key, (2, 4, 8, 8, 16), dtype=jnp.float32)
    _check(x1, (2, 3, 5), 0.0)

    # Case 2: W/H kernel of 1 -> no W padding (single contiguous interior store),
    # non-zero pad value, D-only halo.
    x2 = jax.random.normal(jax.random.PRNGKey(0), (1, 2, 4, 8, 16), dtype=jnp.float32)
    _check(x2, (3, 1, 1), 2.5)

    print("KERNEL_OK")
</pallas_src>

<mosaic_0001>
module attributes {stable_mosaic.version = 11 : i64} {
  func.func @pad_kernel(%arg0: i32, %arg1: memref<4x8x128xf32, #tpu.memory_space<vmem>>, %arg2: memref<4x9x200xf32, #tpu.memory_space<vmem>>) attributes {dimension_semantics = [#tpu.dimension_semantics<parallel>], iteration_bounds = array<i64: 2>, scalar_prefetch = 0 : i64, scratch_operands = 0 : i64, tpu.core_type = #tpu.core_type<tc>, window_params = [{transform_indices = @transform_0, window_bounds = array<i64: 4, 8, 128>}, {transform_indices = @transform_1, window_bounds = array<i64: 4, 9, 200>}]} {
    %cst = arith.constant 0.000000e+00 : f32
    %0 = vector.broadcast %cst : f32 to vector<4x9x200xf32>
    %c0 = arith.constant 0 : index
    %c0_0 = arith.constant 0 : index
    %c0_1 = arith.constant 0 : index
    %1 = vector.load %arg2[%c0, %c0_0, %c0_1] : memref<4x9x200xf32, #tpu.memory_space<vmem>>, vector<4x9x200xf32>
    tpu.vector_store %arg2[%c0, %c0_0, %c0_1], %0 {strides = array<i32>} : memref<4x9x200xf32, #tpu.memory_space<vmem>>, vector<4x9x200xf32>,
    %c0_2 = arith.constant 0 : index
    %c0_3 = arith.constant 0 : index
    %c0_4 = arith.constant 0 : index
    %2 = vector.load %arg1[%c0_2, %c0_3, %c0_4] : memref<4x8x128xf32, #tpu.memory_space<vmem>>, vector<4x8x16xf32>
    %c0_5 = arith.constant 0 : index
    %c0_6 = arith.constant 0 : index
    %c22 = arith.constant 22 : index
    %3 = vector.load %arg2[%c0_5, %c0_6, %c22] : memref<4x9x200xf32, #tpu.memory_space<vmem>>, vector<4x8x16xf32>
    tpu.vector_store %arg2[%c0_5, %c0_6, %c22], %2 {strides = array<i32>} : memref<4x9x200xf32, #tpu.memory_space<vmem>>, vector<4x8x16xf32>,
    %c0_7 = arith.constant 0 : index
    %c0_8 = arith.constant 0 : index
    %c16 = arith.constant 16 : index
    %4 = vector.load %arg1[%c0_7, %c0_8, %c16] : memref<4x8x128xf32, #tpu.memory_space<vmem>>, vector<4x8x16xf32>
    %c0_9 = arith.constant 0 : index
    %c0_10 = arith.constant 0 : index
    %c42 = arith.constant 42 : index
    %5 = vector.load %arg2[%c0_9, %c0_10, %c42] : memref<4x9x200xf32, #tpu.memory_space<vmem>>, vector<4x8x16xf32>
    tpu.vector_store %arg2[%c0_9, %c0_10, %c42], %4 {strides = array<i32>} : memref<4x9x200xf32, #tpu.memory_space<vmem>>, vector<4x8x16xf32>,
    %c0_11 = arith.constant 0 : index
    %c0_12 = arith.constant 0 : index
    %c32 = arith.constant 32 : index
    %6 = vector.load %arg1[%c0_11, %c0_12, %c32] : memref<4x8x128xf32, #tpu.memory_space<vmem>>, vector<4x8x16xf32>
    %c0_13 = arith.constant 0 : index
    %c0_14 = arith.constant 0 : index
    %c62 = arith.constant 62 : index
    %7 = vector.load %arg2[%c0_13, %c0_14, %c62] : memref<4x9x200xf32, #tpu.memory_space<vmem>>, vector<4x8x16xf32>
    tpu.vector_store %arg2[%c0_13, %c0_14, %c62], %6 {strides = array<i32>} : memref<4x9x200xf32, #tpu.memory_space<vmem>>, vector<4x8x16xf32>,
    %c0_15 = arith.constant 0 : index
    %c0_16 = arith.constant 0 : index
    %c48 = arith.constant 48 : index
    %8 = vector.load %arg1[%c0_15, %c0_16, %c48] : memref<4x8x128xf32, #tpu.memory_space<vmem>>, vector<4x8x16xf32>
    %c0_17 = arith.constant 0 : index
    %c0_18 = arith.constant 0 : index
    %c82 = arith.constant 82 : index
    %9 = vector.load %arg2[%c0_17, %c0_18, %c82] : memref<4x9x200xf32, #tpu.memory_space<vmem>>, vector<4x8x16xf32>
    tpu.vector_store %arg2[%c0_17, %c0_18, %c82], %8 {strides = array<i32>} : memref<4x9x200xf32, #tpu.memory_space<vmem>>, vector<4x8x16xf32>,
    %c0_19 = arith.constant 0 : index
    %c0_20 = arith.constant 0 : index
    %c64 = arith.constant 64 : index
    %10 = vector.load %arg1[%c0_19, %c0_20, %c64] : memref<4x8x128xf32, #tpu.memory_space<vmem>>, vector<4x8x16xf32>
    %c0_21 = arith.constant 0 : index
    %c0_22 = arith.constant 0 : index
    %c102 = arith.constant 102 : index
    %11 = vector.load %arg2[%c0_21, %c0_22, %c102] : memref<4x9x200xf32, #tpu.memory_space<vmem>>, vector<4x8x16xf32>
    tpu.vector_store %arg2[%c0_21, %c0_22, %c102], %10 {strides = array<i32>} : memref<4x9x200xf32, #tpu.memory_space<vmem>>, vector<4x8x16xf32>,
    %c0_23 = arith.constant 0 : index
    %c0_24 = arith.constant 0 : index
    %c80 = arith.constant 80 : index
    %12 = vector.load %arg1[%c0_23, %c0_24, %c80] : memref<4x8x128xf32, #tpu.memory_space<vmem>>, vector<4x8x16xf32>
    %c0_25 = arith.constant 0 : index
    %c0_26 = arith.constant 0 : index
    %c122 = arith.constant 122 : index
    %13 = vector.load %arg2[%c0_25, %c0_26, %c122] : memref<4x9x200xf32, #tpu.memory_space<vmem>>, vector<4x8x16xf32>
    tpu.vector_store %arg2[%c0_25, %c0_26, %c122], %12 {strides = array<i32>} : memref<4x9x200xf32, #tpu.memory_space<vmem>>, vector<4x8x16xf32>,
    %c0_27 = arith.constant 0 : index
    %c0_28 = arith.constant 0 : index
    %c96 = arith.constant 96 : index
    %14 = vector.load %arg1[%c0_27, %c0_28, %c96] : memref<4x8x128xf32, #tpu.memory_space<vmem>>, vector<4x8x16xf32>
    %c0_29 = arith.constant 0 : index
    %c0_30 = arith.constant 0 : index
    %c142 = arith.constant 142 : index
    %15 = vector.load %arg2[%c0_29, %c0_30, %c142] : memref<4x9x200xf32, #tpu.memory_space<vmem>>, vector<4x8x16xf32>
    tpu.vector_store %arg2[%c0_29, %c0_30, %c142], %14 {strides = array<i32>} : memref<4x9x200xf32, #tpu.memory_space<vmem>>, vector<4x8x16xf32>,
    %c0_31 = arith.constant 0 : index
    %c0_32 = arith.constant 0 : index
    %c112 = arith.constant 112 : index
    %16 = vector.load %arg1[%c0_31, %c0_32, %c112] : memref<4x8x128xf32, #tpu.memory_space<vmem>>, vector<4x8x16xf32>
    %c0_33 = arith.constant 0 : index
    %c0_34 = arith.constant 0 : index
    %c162 = arith.constant 162 : index
    %17 = vector.load %arg2[%c0_33, %c0_34, %c162] : memref<4x9x200xf32, #tpu.memory_space<vmem>>, vector<4x8x16xf32>
    tpu.vector_store %arg2[%c0_33, %c0_34, %c162], %16 {strides = array<i32>} : memref<4x9x200xf32, #tpu.memory_space<vmem>>, vector<4x8x16xf32>,
    return
  }
  func.func @transform_0(%arg0: i32) -> (i32, i32, i32) {
    %c0_i32 = arith.constant 0 : i32
    %c0_i32_0 = arith.constant 0 : i32
    %c0_i32_1 = arith.constant 0 : i32
    return %arg0, %c0_i32, %c0_i32_0 : i32, i32, i32
  }
  func.func @transform_1(%arg0: i32) -> (i32, i32, i32) {
    %c0_i32 = arith.constant 0 : i32
    %c0_i32_0 = arith.constant 0 : i32
    %c0_i32_1 = arith.constant 0 : i32
    return %arg0, %c0_i32, %c0_i32_0 : i32, i32, i32
  }
}

</mosaic_0001>

<llo_original>
// kernel: tpu_custom_call.1
$region0: #{tpu_custom_call.1}
  #allocation0 [shape = 'u32[]', space=smem, size = 0x4, offset = 0x4, fixed_abs, tag = 'smem constant byte address 0x4 - core index']
  #allocation1 [shape = 'u32[72,128]{1,0:T(1,128)}', space=vmem, size = 0x9000, scoped, tag = 'internal scratch']
  %s0 = inlined_call_operand.hbm [shape: f32[8,8,128], index: 0, kind: input, shape index: {}]
  %s1 = inlined_call_operand.vmem [shape: f32[8,9,200], index: 1, kind: output, shape index: {}]
  %s2 = sld [smem:[#allocation0]]
  $region41: #{tpu_custom_call.1} parent=0
    _
  %s4 = ssub.s32 1, %s2
  %s5 = scalar_select 0, %s4, %s2
  $region1: #{tpu_custom_call.1} parent=0
    #allocation2 [shape = 'u8[32768]{0}', space=vmem, size = 0x8000, scoped, tag = 'input window, operand 0']
    #allocation3 [shape = 's32[2]{0}', space=sflag, size = 0x8, scoped, tag = 'scoped memory for tpu_custom_call.1']
    %6 = vsyncpa [#allocation3], 0
    %s7 = scalar_lea.sflag [#allocation3], 1
    %8 = vsyncpa %s7, 0
    loop: start=0, step=1, limit=4
    $region2: #{tpu_custom_call.1} parent=1 // loop_pre_header
      _
    $region3: #{tpu_custom_call.1} parent=1 // loop_header
      %s10 = sphi 0, %s14
      %p11 = scmp.ge.s32.totalorder %s10, 4
      %s20 = sphi 0, %s22
      %s23 = sphi 0, %s20
      %s24 = sphi 0, %s23
      %s40 = sphi 0, %s24
      %s46 = sphi 0, %s48
      %s49 = sphi 0, %s46
      %s50 = sphi 0, %s49
      %s66 = sphi 0, %s50
    $region4: #{tpu_custom_call.1} parent=1 // loop_header_branch
      %13 = sbr.rel (%p11) target = $region8
    $region5: #{tpu_custom_call.1} parent=1 // loop_body
      %s15 = ssub.s32 %s10, 1
      %s16 = ssub.s32 %s10, 2
      %s17 = sadd.s32 %s10, 1
      %s18 = ssub.s32 %s10, %s17
      %p19 = scmp.eq.s32.totalorder %s18, 0
      %s21 = sadd.s32 %s20, 1
      %s22 = scalar_select %p19, %s20, %s21
      %p25 = pneg %p19
      %p26 = scmp.eq.s32.totalorder %s10, 1
      %p27 = por %p25, %p26
      %p28 = scmp.ne.s32.totalorder %s20, %s23
      %p29 = scmp.eq.s32.totalorder %s10, 0
      %p30 = por %p28, %p29
      %p31 = scmp.ne.s32.totalorder %s20, %s23
      %p32 = scmp.eq.s32.totalorder %s15, 1
      %p33 = por %p31, %p32
      %p34 = scmp.ne.s32.totalorder %s23, %s24
      %p35 = scmp.eq.s32.totalorder %s15, 0
      %p36 = por %p34, %p35
      %p37 = scmp.ne.s32.totalorder %s23, %s24
      %p38 = scmp.eq.s32.totalorder %s16, 1
      %p39 = por %p37, %p38
      %p41 = scmp.ne.s32.totalorder %s24, %s40
      %p42 = scmp.eq.s32.totalorder %s16, 0
      %p43 = por %p41, %p42
      %s44 = ssub.s32 %s10, %s17
      %p45 = scmp.eq.s32.totalorder %s44, 0
      %s47 = sadd.s32 %s46, 1
      %s48 = scalar_select %p45, %s46, %s47
      %p51 = pneg %p45
      %p52 = scmp.eq.s32.totalorder %s10, 1
      %p53 = por %p51, %p52
      %p54 = scmp.ne.s32.totalorder %s46, %s49
      %p55 = scmp.eq.s32.totalorder %s10, 0
      %p56 = por %p54, %p55
      %p57 = scmp.ne.s32.totalorder %s46, %s49
      %p58 = scmp.eq.s32.totalorder %s15, 1
      %p59 = por %p57, %p58
      %p60 = scmp.ne.s32.totalorder %s49, %s50
      %p61 = scmp.eq.s32.totalorder %s15, 0
      %p62 = por %p60, %p61
      %p63 = scmp.ne.s32.totalorder %s49, %s50
      %p64 = scmp.eq.s32.totalorder %s16, 1
      %p65 = por %p63, %p64
      %p67 = scmp.ne.s32.totalorder %s50, %s66
      %p68 = scmp.eq.s32.totalorder %s16, 0
      %p69 = por %p67, %p68
      %p70 = scmp.le.s32.totalorder 1, %s10
      %p71 = scmp.lt.s32.totalorder %s10, 3
      %p72 = pnand %p70, %p71
      %p73 = pneg %p72
      // Predicated region
      $region9: #{tpu_custom_call.1} parent=5 // pred_check
        _
      $region10: #{tpu_custom_call.1} parent=5 // pred_check_branch
        %75 = sbr.rel (%p72) target = $region12
      $region11: #{tpu_custom_call.1} parent=5 // pred_region
        %s76 = ssub.s32 %s10, 1
      $region12: #{tpu_custom_call.1} parent=5 // pred_fallthru
        _
      %p77 = scmp.lt.s32.totalorder %s10, 2
      // Predicated region
      $region13: #{tpu_custom_call.1} parent=5 // pred_check
        %p78 = pneg %p77
      $region14: #{tpu_custom_call.1} parent=5 // pred_check_branch
        %80 = sbr.rel (%p78) target = $region16
      $region15: #{tpu_custom_call.1} parent=5 // pred_region
        // Predicated region
        $region17: #{tpu_custom_call.1} parent=15 // pred_check
          %p81 = pneg %p30
        $region18: #{tpu_custom_call.1} parent=15 // pred_check_branch
          %83 = sbr.rel (%p81) target = $region20
        $region19: #{tpu_custom_call.1} parent=15 // pred_region
          %s84 = sand.u32 %s20, 1
          %s85 = scalar_lea.sflag [#allocation3], %s84
          %s86 = sand.u32 %s20, 1
          %s87 = smul.addr %s86, 32
          %s88 = scalar_lea.vmem [#allocation2], %s87
          %s89 = smul.u32 4, %s10
          %91 = vsyncadd %s85, 0
          %s92 = smul.addr %s89, 8
          %s93 = scalar_lea.hbm %s0, %s92
          %s94 = sshll.u32 %s93, 4
          %s95 = int_to_ptr.hbm [resolvable:$true] %s94
          %s96 = sshll.u32 %s88, 4
          %s97 = int_to_ptr.vmem [resolvable:$true] %s96
          %102 = dma.hbm_to_vmem [thread:$0]  %s95, 512, %s97, %s85, 128, 128, 8
        $region20: #{tpu_custom_call.1} parent=15 // pred_fallthru
          _
      $region16: #{tpu_custom_call.1} parent=5 // pred_fallthru
        _
      %p103 = scmp.le.s32.totalorder 1, %s10
      %p104 = scmp.lt.s32.totalorder %s10, 3
      %p105 = pnand %p103, %p104
      %p106 = pneg %p105
      // Predicated region
      $region21: #{tpu_custom_call.1} parent=5 // pred_check
        _
      $region22: #{tpu_custom_call.1} parent=5 // pred_check_branch
        %108 = sbr.rel (%p105) target = $region24
      $region23: #{tpu_custom_call.1} parent=5 // pred_region
        %s109 = ssub.s32 %s10, 1
        %s110 = sand.u32 %s23, 1
        %s111 = scalar_lea.sflag [#allocation3], %s110
        %s112 = sand.u32 %s23, 1
        %s113 = smul.addr %s112, 32
        %s114 = scalar_lea.vmem [#allocation2], %s113
        // Predicated region
        $region25: #{tpu_custom_call.1} parent=23 // pred_check
          %p115 = pneg %p36
        $region26: #{tpu_custom_call.1} parent=23 // pred_check_branch
          %117 = sbr.rel (%p115) target = $region28
        $region27: #{tpu_custom_call.1} parent=23 // pred_region
          %119 = dma.done %s111, 512
        $region28: #{tpu_custom_call.1} parent=23 // pred_fallthru
          _
        %s120 = sand.u32 %s23, 1
        %s121 = scalar_lea.sflag [#allocation3], %s120
        %s122 = sand.u32 %s23, 1
        %s123 = smul.addr %s122, 32
        %s124 = scalar_lea.vmem [#allocation2], %s123
        %p125 = pneg %p36
        %p126 = pneg %p33
        %p127 = pneg %p62
        %p128 = pneg %p59
        %s129 = smul.u32 4, %s15
        %p130 = scmp.lt.s32.totalorder %s129, 7
        %s131 = scalar_select %p130, %s129, 7
        %s132 = smul.addr %s131, 4
        %s133 = smul.addr %s132, 8
        %s134 = scalar_lea.vmem %s1, %s133
        %s135 = smul.u32 4, %s15
        %s136 = smul.u32 4, %s15
        %p137 = scmp.lt.s32.totalorder %s136, 7
        %s138 = scalar_select %p137, %s136, 7
        %s139 = smul.addr %s138, 4
        %s140 = smul.addr %s139, 8
        %s141 = scalar_lea.vmem %s1, %s140
        %s142 = smul.u32 4, %s15
        %143 = vst [vmem:[%s141] sm:$0xff] 0.0
        %vm144 = vcmask 588800
        %145 = vst.msk [vmem:[%s141 + $0x8] sm:$0xff] %vm144, 0.0
        %146 = vst [vmem:[%s141 + $0x10] sm:$0x1] 0.0
        %vm147 = vcmask 581632
        %148 = vst.msk [vmem:[%s141 + $0x18] sm:$0x1] %vm147, 0.0
        %149 = vst [vmem:[%s141 + $0x20] sm:$0xff] 0.0
        %150 = vst.msk [vmem:[%s141 + $0x28] sm:$0xff] %vm144, 0.0
        %151 = vst [vmem:[%s141 + $0x30] sm:$0x1] 0.0
        %152 = vst.msk [vmem:[%s141 + $0x38] sm:$0x1] %vm147, 0.0
        %153 = vst [vmem:[%s141 + $0x40] sm:$0xff] 0.0
        %154 = vst.msk [vmem:[%s141 + $0x48] sm:$0xff] %vm144, 0.0
        %155 = vst [vmem:[%s141 + $0x50] sm:$0x1] 0.0
        %156 = vst.msk [vmem:[%s141 + $0x58] sm:$0x1] %vm147, 0.0
        %157 = vst [vmem:[%s141 + $0x60] sm:$0xff] 0.0
        %158 = vst.msk [vmem:[%s141 + $0x68] sm:$0xff] %vm144, 0.0
        %159 = vst [vmem:[%s141 + $0x70] sm:$0x1] 0.0
        %160 = vst.msk [vmem:[%s141 + $0x78] sm:$0x1] %vm147, 0.0
        %v161 = vld [vmem:[%s114] sm:$0xff]
        %v162 = vld [vmem:[%s114 + $0x8] sm:$0xff]
        %v163 = vld [vmem:[%s114 + $0x10] sm:$0xff]
        %v164 = vld [vmem:[%s114 + $0x18] sm:$0xff]
        %169 = vrot.lane.b32.xlu0 %v161, 22
        %v170 = vpop.permute.xlu0 %169
        %171 = vrot.lane.b32.xlu0 %v162, 22
        %v172 = vpop.permute.xlu0 %171
        %173 = vrot.lane.b32.xlu0 %v163, 22
        %v174 = vpop.permute.xlu0 %173
        %175 = vrot.lane.b32.xlu0 %v164, 22
        %v176 = vpop.permute.xlu0 %175
        %vm181 = vcmask 310448
        %182 = vst.msk [vmem:[%s141] sm:$0xff] %vm181, %v170
        %183 = vst.msk [vmem:[%s141 + $0x20] sm:$0xff] %vm181, %v172
        %184 = vst.msk [vmem:[%s141 + $0x40] sm:$0xff] %vm181, %v174
        %185 = vst.msk [vmem:[%s141 + $0x60] sm:$0xff] %vm181, %v176
        %v186 = vld [vmem:[%s114] sm:$0xff]
        %v187 = vld [vmem:[%s114 + $0x8] sm:$0xff]
        %v188 = vld [vmem:[%s114 + $0x10] sm:$0xff]
        %v189 = vld [vmem:[%s114 + $0x18] sm:$0xff]
        %194 = vrot.lane.b32.xlu0 %v186, 26
        %v195 = vpop.permute.xlu0 %194
        %196 = vrot.lane.b32.xlu0 %v187, 26
        %v197 = vpop.permute.xlu0 %196
        %198 = vrot.lane.b32.xlu0 %v188, 26
        %v199 = vpop.permute.xlu0 %198
        %200 = vrot.lane.b32.xlu0 %v189, 26
        %v201 = vpop.permute.xlu0 %200
        %vm206 = vcmask 474448
        %207 = vst.msk [vmem:[%s141] sm:$0xff] %vm206, %v195
        %208 = vst.msk [vmem:[%s141 + $0x20] sm:$0xff] %vm206, %v197
        %209 = vst.msk [vmem:[%s141 + $0x40] sm:$0xff] %vm206, %v199
        %210 = vst.msk [vmem:[%s141 + $0x60] sm:$0xff] %vm206, %v201
        %v211 = vld [vmem:[%s114] sm:$0xff]
        %v212 = vld [vmem:[%s114 + $0x8] sm:$0xff]
        %v213 = vld [vmem:[%s114 + $0x10] sm:$0xff]
        %v214 = vld [vmem:[%s114 + $0x18] sm:$0xff]
        %219 = vrot.lane.b32.xlu0 %v211, 30
        %v220 = vpop.permute.xlu0 %219
        %221 = vrot.lane.b32.xlu0 %v212, 30
        %v222 = vpop.permute.xlu0 %221
        %223 = vrot.lane.b32.xlu0 %v213, 30
        %v224 = vpop.permute.xlu0 %223
        %225 = vrot.lane.b32.xlu0 %v214, 30
        %v226 = vpop.permute.xlu0 %225
        %vm231 = vcmask 638448
        %232 = vst.msk [vmem:[%s141] sm:$0xff] %vm231, %v220
        %233 = vst.msk [vmem:[%s141 + $0x20] sm:$0xff] %vm231, %v222
        %234 = vst.msk [vmem:[%s141 + $0x40] sm:$0xff] %vm231, %v224
        %235 = vst.msk [vmem:[%s141 + $0x60] sm:$0xff] %vm231, %v226
        %v236 = vld [vmem:[%s114] sm:$0xff]
        %v237 = vld [vmem:[%s114 + $0x8] sm:$0xff]
        %v238 = vld [vmem:[%s114 + $0x10] sm:$0xff]
        %v239 = vld [vmem:[%s114 + $0x18] sm:$0xff]
        %244 = vrot.lane.b32.xlu0 %v236, 34
        %v245 = vpop.permute.xlu0 %244
        %246 = vrot.lane.b32.xlu0 %v237, 34
        %v247 = vpop.permute.xlu0 %246
        %248 = vrot.lane.b32.xlu0 %v238, 34
        %v249 = vpop.permute.xlu0 %248
        %250 = vrot.lane.b32.xlu0 %v239, 34
        %v251 = vpop.permute.xlu0 %250
        %vm256 = vcmask 802448
        %257 = vst.msk [vmem:[%s141] sm:$0xff] %vm256, %v245
        %258 = vst.msk [vmem:[%s141 + $0x20] sm:$0xff] %vm256, %v247
        %259 = vst.msk [vmem:[%s141 + $0x40] sm:$0xff] %vm256, %v249
        %260 = vst.msk [vmem:[%s141 + $0x60] sm:$0xff] %vm256, %v251
        %v261 = vld [vmem:[%s114] sm:$0xff]
        %v262 = vld [vmem:[%s114 + $0x8] sm:$0xff]
        %v263 = vld [vmem:[%s114 + $0x10] sm:$0xff]
        %v264 = vld [vmem:[%s114 + $0x18] sm:$0xff]
        %269 = vrot.lane.b32.xlu0 %v261, 38
        %v270 = vpop.permute.xlu0 %269
        %271 = vrot.lane.b32.xlu0 %v262, 38
        %v272 = vpop.permute.xlu0 %271
        %273 = vrot.lane.b32.xlu0 %v263, 38
        %v274 = vpop.permute.xlu0 %273
        %275 = vrot.lane.b32.xlu0 %v264, 38
        %v276 = vpop.permute.xlu0 %275
        %vm281 = vcmask 966448
        %282 = vst.msk [vmem:[%s141] sm:$0xff] %vm281, %v270
        %283 = vst.msk [vmem:[%s141 + $0x20] sm:$0xff] %vm281, %v272
        %284 = vst.msk [vmem:[%s141 + $0x40] sm:$0xff] %vm281, %v274
        %285 = vst.msk [vmem:[%s141 + $0x60] sm:$0xff] %vm281, %v276
        %v286 = vld [vmem:[%s114] sm:$0xff]
        %v287 = vld [vmem:[%s114 + $0x8] sm:$0xff]
        %v288 = vld [vmem:[%s114 + $0x10] sm:$0xff]
        %v289 = vld [vmem:[%s114 + $0x18] sm:$0xff]
        %294 = vrot.lane.b32.xlu0 %v286, 42
        %v295 = vpop.permute.xlu0 %294
        %296 = vrot.lane.b32.xlu0 %v287, 42
        %v297 = vpop.permute.xlu0 %296
        %298 = vrot.lane.b32.xlu0 %v288, 42
        %v299 = vpop.permute.xlu0 %298
        %300 = vrot.lane.b32.xlu0 %v289, 42
        %v301 = vpop.permute.xlu0 %300
        %vm306 = vcmask 1048528
        %307 = vst.msk [vmem:[%s141] sm:$0xff] %vm306, %v295
        %vm308 = vcmask 80896
        %309 = vst.msk [vmem:[%s141 + $0x8] sm:$0xff] %vm308, %v295
        %310 = vst.msk [vmem:[%s141 + $0x20] sm:$0xff] %vm306, %v297
        %311 = vst.msk [vmem:[%s141 + $0x28] sm:$0xff] %vm308, %v297
        %312 = vst.msk [vmem:[%s141 + $0x40] sm:$0xff] %vm306, %v299
        %313 = vst.msk [vmem:[%s141 + $0x48] sm:$0xff] %vm308, %v299
        %314 = vst.msk [vmem:[%s141 + $0x60] sm:$0xff] %vm306, %v301
        %315 = vst.msk [vmem:[%s141 + $0x68] sm:$0xff] %vm308, %v301
        %v316 = vld [vmem:[%s114] sm:$0xff]
        %v317 = vld [vmem:[%s114 + $0x8] sm:$0xff]
        %v318 = vld [vmem:[%s114 + $0x10] sm:$0xff]
        %v319 = vld [vmem:[%s114 + $0x18] sm:$0xff]
        %324 = vrot.lane.b32.xlu0 %v316, 46
        %v325 = vpop.permute.xlu0 %324
        %326 = vrot.lane.b32.xlu0 %v317, 46
        %v327 = vpop.permute.xlu0 %326
        %328 = vrot.lane.b32.xlu0 %v318, 46
        %v329 = vpop.permute.xlu0 %328
        %330 = vrot.lane.b32.xlu0 %v319, 46
        %v331 = vpop.permute.xlu0 %330
        %vm336 = vcmask 244848
        %337 = vst.msk [vmem:[%s141 + $0x8] sm:$0xff] %vm336, %v325
        %338 = vst.msk [vmem:[%s141 + $0x28] sm:$0xff] %vm336, %v327
        %339 = vst.msk [vmem:[%s141 + $0x48] sm:$0xff] %vm336, %v329
        %340 = vst.msk [vmem:[%s141 + $0x68] sm:$0xff] %vm336, %v331
        %v341 = vld [vmem:[%s114] sm:$0xff]
        %v342 = vld [vmem:[%s114 + $0x8] sm:$0xff]
        %v343 = vld [vmem:[%s114 + $0x10] sm:$0xff]
        %v344 = vld [vmem:[%s114 + $0x18] sm:$0xff]
        %349 = vrot.lane.b32.xlu0 %v341, 50
        %v350 = vpop.permute.xlu0 %349
        %351 = vrot.lane.b32.xlu0 %v342, 50
        %v352 = vpop.permute.xlu0 %351
        %353 = vrot.lane.b32.xlu0 %v343, 50
        %v354 = vpop.permute.xlu0 %353
        %355 = vrot.lane.b32.xlu0 %v344, 50
        %v356 = vpop.permute.xlu0 %355
        %vm361 = vcmask 408848
        %362 = vst.msk [vmem:[%s141 + $0x8] sm:$0xff] %vm361, %v350
        %363 = vst.msk [vmem:[%s141 + $0x28] sm:$0xff] %vm361, %v352
        %364 = vst.msk [vmem:[%s141 + $0x48] sm:$0xff] %vm361, %v354
        %365 = vst.msk [vmem:[%s141 + $0x68] sm:$0xff] %vm361, %v356
        %s366 = smul.u32 4, %s15
        %p367 = scmp.lt.s32.totalorder %s366, 7
        %s368 = scalar_select %p367, %s366, 7
        %s369 = smul.addr %s368, 4
        %s370 = smul.addr %s369, 8
        %s371 = scalar_lea.vmem %s1, %s370
        // Predicated region
        $region29: #{tpu_custom_call.1} parent=23 // pred_check
          %p372 = pneg %p59
        $region30: #{tpu_custom_call.1} parent=23 // pred_check_branch
          %374 = sbr.rel (%p372) target = $region32
        $region31: #{tpu_custom_call.1} parent=23 // pred_region
          %s375 = smul.u32 4, %s15
        $region32: #{tpu_custom_call.1} parent=23 // pred_fallthru
          _
      $region24: #{tpu_custom_call.1} parent=5 // pred_fallthru
        _
      %p376 = scmp.le.s32.totalorder 2, %s10
      // Predicated region
      $region33: #{tpu_custom_call.1} parent=5 // pred_check
        %p377 = pneg %p376
      $region34: #{tpu_custom_call.1} parent=5 // pred_check_branch
        %379 = sbr.rel (%p377) target = $region36
      $region35: #{tpu_custom_call.1} parent=5 // pred_region
        %s380 = ssub.s32 %s10, 2
        // Predicated region
        $region37: #{tpu_custom_call.1} parent=35 // pred_check
          %p381 = pneg %p65
        $region38: #{tpu_custom_call.1} parent=35 // pred_check_branch
          %383 = sbr.rel (%p381) target = $region40
        $region39: #{tpu_custom_call.1} parent=35 // pred_region
          %s384 = smul.u32 4, %s16
          %p385 = scmp.lt.s32.totalorder %s384, 7
          %s386 = scalar_select %p385, %s384, 7
          %s387 = smul.addr %s386, 4
          %s388 = smul.addr %s387, 8
          %s389 = scalar_lea.vmem %s1, %s388
        $region40: #{tpu_custom_call.1} parent=35 // pred_fallthru
          _
      $region36: #{tpu_custom_call.1} parent=5 // pred_fallthru
        _
    $region6: #{tpu_custom_call.1} parent=1 // loop_footer
      %s14 = sadd.s32 1, %s10
    $region7: #{tpu_custom_call.1} parent=1 // loop_footer_branch
      %9 = sbr.rel target = $region3
    $region8: #{tpu_custom_call.1} parent=1 // loop_exit
      _
    %390 = vsyncpa [#allocation3], 1
    %s391 = scalar_lea.sflag [#allocation3], 1
    %392 = vsyncpa %s391, 1

</llo_original>
